<compile_context>
chip_gen: v6e
topology: v6e:2x2x1
jax: 0.10.0
libtpu: 0.0.40
codegen_flags: <defaults>
</compile_context>

<pallas_src>
import functools
import math

import jax
import jax.numpy as jnp
from jax.experimental import pallas as pl
from jax.experimental.pallas import tpu as pltpu  # noqa: F401  (TPU backend)


def _round_up(n: int, m: int) -> int:
    return ((n + m - 1) // m) * m


def _mlp_kernel(x_ref, w_ref, b_ref, o_ref, *, dims):
    """Fused MLP.

    x_ref: (B, dims[0])    activation at its natural shape (no padding)
    w_ref: (L, D, D)       stacked weights; layer i live in [:dims[i], :dims[i+1]]
    b_ref: (L, 1, D)       stacked biases;  layer i live in [:, :dims[i+1]]
    o_ref: (B, dims[-1])   output
    """
    num_layers = len(dims) - 1
    out_features = dims[-1]
    h = x_ref[...]                                    # (B, dims[0]) f32, stays in vregs
    for i in range(num_layers):
        k_in = dims[i]
        w_full = w_ref[i]                             # (D, D)
        b_full = b_ref[i]                             # (1, D)
        if i < num_layers - 1:
            k_out = dims[i + 1]
            w = w_full[:k_in, :k_out]                 # static slice -> live block only
            b = b_full[:, :k_out]
            h = jnp.maximum(
                jnp.dot(h, w, preferred_element_type=jnp.float32) + b, 0.0)
        else:
            # Last layer: keep the slab's lane width through the matmul (pad columns
            # have zero weights / zero bias, numerically inert) and slice at the store,
            # so the kernel writes the (B, output_size) result directly.
            w = w_full[:k_in, :]
            h = jnp.dot(h, w, preferred_element_type=jnp.float32) + b_full
            o_ref[...] = h[:, :out_features].astype(o_ref.dtype)


def _mlp_forward(x, w_all, b_all, *, dims):
    """x: (B, dims[0]) f32. w_all: (L, D, D) f32. b_all: (L, 1, D) f32."""
    B = x.shape[0]
    out_features = dims[-1]
    return pl.pallas_call(
        functools.partial(_mlp_kernel, dims=dims),
        out_shape=jax.ShapeDtypeStruct((B, out_features), jnp.float32),
        in_specs=[
            pl.BlockSpec(x.shape, lambda: (0, 0)),          # full-array blocks: legal
            pl.BlockSpec(w_all.shape, lambda: (0, 0, 0)),   # one DMA for all weights
            pl.BlockSpec(b_all.shape, lambda: (0, 0, 0)),   # one DMA for all biases
        ],
        out_specs=pl.BlockSpec((B, out_features), lambda: (0, 0)),
    )(x, w_all, b_all)


class CriticNetPallas:
    """Mirror of the PyTorch CriticNet forward pass as a single fused Pallas kernel."""

    def __init__(self, input_size, hidden_size, hidden_layer, output_size, key):
        dims = tuple([input_size] + [hidden_size] * hidden_layer + [output_size])
        num_layers = len(dims) - 1
        # Common slab width so every layer stacks into one array; only rounded to the
        # 8-sublane granule (=> 32 for hidden_size=32, i.e. no 128-lane padding).
        d_pad = _round_up(max(dims), 8)

        self.params = []  # unpadded (w (fan_in, fan_out), b (fan_out,)) for reference
        w_all = jnp.zeros((num_layers, d_pad, d_pad), jnp.float32)
        b_all = jnp.zeros((num_layers, 1, d_pad), jnp.float32)
        for i in range(num_layers):
            fan_in, fan_out = dims[i], dims[i + 1]
            key, kw, kb = jax.random.split(key, 3)
            # PyTorch Linear default init: U(-1/sqrt(fan_in), 1/sqrt(fan_in)).
            bound = 1.0 / math.sqrt(fan_in)
            # Stored pre-transposed: (fan_in, fan_out) so the kernel does x @ W + b.
            w = jax.random.uniform(kw, (fan_in, fan_out), jnp.float32, -bound, bound)
            b = jax.random.uniform(kb, (fan_out,), jnp.float32, -bound, bound)
            self.params.append((w, b))
            w_all = w_all.at[i, :fan_in, :fan_out].set(w)
            b_all = b_all.at[i, 0, :fan_out].set(b)

        self.w_all = w_all
        self.b_all = b_all
        self.dims = dims
        self.output_size = output_size
        self._forward = jax.jit(functools.partial(_mlp_forward, dims=dims))

    def __call__(self, x):
        return self._forward(x, self.w_all, self.b_all)


if __name__ == "__main__":
    key = jax.random.PRNGKey(0)
    key, kx = jax.random.split(key)

    batch = 2
    input_size = 8
    hidden_size = 32
    hidden_layer = 2
    output_size = 1

    net = CriticNetPallas(input_size, hidden_size, hidden_layer, output_size, key)
    x = jax.random.normal(kx, (batch, input_size), jnp.float32)

    out = net(x)
    jax.block_until_ready(out)

    # Reference check in plain JAX with the unpadded parameters (same math).
    ref = x
    n = len(net.params)
    for i, (w, b) in enumerate(net.params):
        ref = ref @ w + b
        if i < n - 1:
            ref = jnp.maximum(ref, 0.0)

    assert out.shape == (batch, output_size), out.shape
    assert jnp.allclose(out, ref, atol=1e-5), "mismatch vs reference"

    print("KERNEL_OK")
</pallas_src>

<mosaic_0001>
module attributes {stable_mosaic.version = 11 : i64} {
  func.func @_mlp_kernel(%arg0: memref<2x8xf32, #tpu.memory_space<vmem>>, %arg1: memref<3x32x32xf32, #tpu.memory_space<vmem>>, %arg2: memref<3x1x32xf32, #tpu.memory_space<vmem>>, %arg3: memref<2x1xf32, #tpu.memory_space<vmem>>) attributes {dimension_semantics = [], scalar_prefetch = 0 : i64, scratch_operands = 0 : i64, tpu.core_type = #tpu.core_type<tc>} {
    %c0 = arith.constant 0 : index
    %c0_0 = arith.constant 0 : index
    %0 = vector.load %arg0[%c0, %c0_0] : memref<2x8xf32, #tpu.memory_space<vmem>>, vector<2x8xf32>
    %c0_1 = arith.constant 0 : index
    %c0_2 = arith.constant 0 : index
    %c0_3 = arith.constant 0 : index
    %1 = vector.load %arg1[%c0_1, %c0_2, %c0_3] : memref<3x32x32xf32, #tpu.memory_space<vmem>>, vector<1x32x32xf32>
    %2 = vector.shape_cast %1 : vector<1x32x32xf32> to vector<32x32xf32>
    %c0_4 = arith.constant 0 : index
    %c0_5 = arith.constant 0 : index
    %c0_6 = arith.constant 0 : index
    %3 = vector.load %arg2[%c0_4, %c0_5, %c0_6] : memref<3x1x32xf32, #tpu.memory_space<vmem>>, vector<1x1x32xf32>
    %4 = vector.shape_cast %3 : vector<1x1x32xf32> to vector<1x32xf32>
    %5 = vector.extract_strided_slice %2 {offsets = [0, 0], sizes = [8, 32], strides = [1, 1]} : vector<32x32xf32> to vector<8x32xf32>
    %cst = arith.constant dense<0.000000e+00> : vector<2x32xf32>
    %6 = tpu.matmul %0, %5, %cst {dimension_numbers = #tpu.dot_dimension_numbers<[1], [0], [0], [1], [0, 0, 1, 1], [], []>} : vector<2x8xf32>, vector<8x32xf32>, vector<2x32xf32> -> vector<2x32xf32>
    %7 = vector.broadcast %4 : vector<1x32xf32> to vector<2x32xf32>
    %8 = arith.addf %6, %7 : vector<2x32xf32>
    %cst_7 = arith.constant 0.000000e+00 : f32
    %9 = vector.broadcast %cst_7 : f32 to vector<2x32xf32>
    %10 = arith.maximumf %8, %9 : vector<2x32xf32>
    %c1 = arith.constant 1 : index
    %c0_8 = arith.constant 0 : index
    %c0_9 = arith.constant 0 : index
    %11 = vector.load %arg1[%c1, %c0_8, %c0_9] : memref<3x32x32xf32, #tpu.memory_space<vmem>>, vector<1x32x32xf32>
    %12 = vector.shape_cast %11 : vector<1x32x32xf32> to vector<32x32xf32>
    %c1_10 = arith.constant 1 : index
    %c0_11 = arith.constant 0 : index
    %c0_12 = arith.constant 0 : index
    %13 = vector.load %arg2[%c1_10, %c0_11, %c0_12] : memref<3x1x32xf32, #tpu.memory_space<vmem>>, vector<1x1x32xf32>
    %14 = vector.shape_cast %13 : vector<1x1x32xf32> to vector<1x32xf32>
    %cst_13 = arith.constant dense<0.000000e+00> : vector<2x32xf32>
    %15 = tpu.matmul %10, %12, %cst_13 {dimension_numbers = #tpu.dot_dimension_numbers<[1], [0], [0], [1], [0, 0, 1, 1], [], []>} : vector<2x32xf32>, vector<32x32xf32>, vector<2x32xf32> -> vector<2x32xf32>
    %16 = vector.broadcast %14 : vector<1x32xf32> to vector<2x32xf32>
    %17 = arith.addf %15, %16 : vector<2x32xf32>
    %cst_14 = arith.constant 0.000000e+00 : f32
    %18 = vector.broadcast %cst_14 : f32 to vector<2x32xf32>
    %19 = arith.maximumf %17, %18 : vector<2x32xf32>
    %c2 = arith.constant 2 : index
    %c0_15 = arith.constant 0 : index
    %c0_16 = arith.constant 0 : index
    %20 = vector.load %arg1[%c2, %c0_15, %c0_16] : memref<3x32x32xf32, #tpu.memory_space<vmem>>, vector<1x32x32xf32>
    %21 = vector.shape_cast %20 : vector<1x32x32xf32> to vector<32x32xf32>
    %c2_17 = arith.constant 2 : index
    %c0_18 = arith.constant 0 : index
    %c0_19 = arith.constant 0 : index
    %22 = vector.load %arg2[%c2_17, %c0_18, %c0_19] : memref<3x1x32xf32, #tpu.memory_space<vmem>>, vector<1x1x32xf32>
    %23 = vector.shape_cast %22 : vector<1x1x32xf32> to vector<1x32xf32>
    %cst_20 = arith.constant dense<0.000000e+00> : vector<2x32xf32>
    %24 = tpu.matmul %19, %21, %cst_20 {dimension_numbers = #tpu.dot_dimension_numbers<[1], [0], [0], [1], [0, 0, 1, 1], [], []>} : vector<2x32xf32>, vector<32x32xf32>, vector<2x32xf32> -> vector<2x32xf32>
    %25 = vector.broadcast %23 : vector<1x32xf32> to vector<2x32xf32>
    %26 = arith.addf %24, %25 : vector<2x32xf32>
    %27 = vector.extract_strided_slice %26 {offsets = [0, 0], sizes = [2, 1], strides = [1, 1]} : vector<2x32xf32> to vector<2x1xf32>
    %c0_21 = arith.constant 0 : index
    %c0_22 = arith.constant 0 : index
    %28 = vector.load %arg3[%c0_21, %c0_22] : memref<2x1xf32, #tpu.memory_space<vmem>>, vector<2x1xf32>
    tpu.vector_store %arg3[%c0_21, %c0_22], %27 {strides = array<i32>} : memref<2x1xf32, #tpu.memory_space<vmem>>, vector<2x1xf32>,
    return
  }
}

</mosaic_0001>

<llo_original>
// kernel: _mlp_forward.1
$region0: #{_mlp_forward.1}
  #allocation0 [shape = 'u32[]', space=smem, size = 0x4, offset = 0x4, fixed_abs, tag = 'smem constant byte address 0x4 - core index']
  #allocation1 [shape = 'u32[144,128]{1,0:T(1,128)}', space=vmem, size = 0x12000, scoped, tag = 'internal scratch']
  %s0 = inlined_call_operand.hbm [shape: f32[2,8], index: 0, kind: input, shape index: {}]
  %s1 = inlined_call_operand.hbm [shape: f32[3,32,32], index: 1, kind: input, shape index: {}]
  %s2 = inlined_call_operand.vmem [shape: f32[3,1,32], index: 2, kind: input, shape index: {}]
  %s3 = inlined_call_operand.vmem [shape: f32[2,1], index: 3, kind: output, shape index: {}]
  %s4 = sld [smem:[#allocation0]]
  $region30: #{_mlp_forward.1} parent=0
    _
  %s6 = ssub.s32 1, %s4
  %s7 = scalar_select 0, %s6, %s4
  $region1: #{_mlp_forward.1} parent=0
    #allocation2 [shape = 'u8[1024]{0}', space=vmem, size = 0x400, scoped, tag = 'input window, operand 0, single buffered']
    #allocation3 [shape = 's32[1]{0}', space=sflag, size = 0x4, scoped, tag = 'scoped memory for _mlp_forward.1']
    #allocation4 [shape = 'u8[49152]{0}', space=vmem, size = 0xc000, scoped, tag = 'input window, operand 1, single buffered']
    #allocation5 [shape = 's32[1]{0}', space=sflag, size = 0x4, scoped, tag = 'scoped memory for _mlp_forward.1']
    %8 = vsyncpa [#allocation3], 0
    %9 = vsyncpa [#allocation5], 0
    // Predicated region
    $region2: #{_mlp_forward.1} parent=1 // pred_check
      _
    $region3: #{_mlp_forward.1} parent=1 // pred_check_branch
      %11 = sbr.rel (0) target = $region5
    $region4: #{_mlp_forward.1} parent=1 // pred_region
      %s13 = ssub.s32 32, 32
      %14 = vsyncadd [#allocation3], %s13
      %s16 = sshll.u32 [#allocation2], 4
      %s17 = int_to_ptr.vmem [resolvable:$true] %s16
      %19 = dma.hbm_to_vmem [thread:$0]  %s0, 32, %s17, [#allocation3]
    $region5: #{_mlp_forward.1} parent=1 // pred_fallthru
      _
    // Predicated region
    $region6: #{_mlp_forward.1} parent=1 // pred_check
      _
    $region7: #{_mlp_forward.1} parent=1 // pred_check_branch
      %21 = sbr.rel (0) target = $region9
    $region8: #{_mlp_forward.1} parent=1 // pred_region
      %s23 = ssub.s32 1536, 1536
      %24 = vsyncadd [#allocation5], %s23
      %s25 = sshll.u32 [#allocation4], 4
      %s26 = int_to_ptr.vmem [resolvable:$true] %s25
      %31 = dma.hbm_to_vmem [thread:$0]  %s1, 1536, %s26, [#allocation5], 128, 128, 8
    $region9: #{_mlp_forward.1} parent=1 // pred_fallthru
      _
    // Predicated region
    $region10: #{_mlp_forward.1} parent=1 // pred_check
      _
    $region11: #{_mlp_forward.1} parent=1 // pred_check_branch
      %33 = sbr.rel (0) target = $region13
    $region12: #{_mlp_forward.1} parent=1 // pred_region
      _
    $region13: #{_mlp_forward.1} parent=1 // pred_fallthru
      _
    // Predicated region
    $region14: #{_mlp_forward.1} parent=1 // pred_check
      _
    $region15: #{_mlp_forward.1} parent=1 // pred_check_branch
      %35 = sbr.rel (0) target = $region17
    $region16: #{_mlp_forward.1} parent=1 // pred_region
      %36 = dma.done [#allocation3], 32
    $region17: #{_mlp_forward.1} parent=1 // pred_fallthru
      _
    // Predicated region
    $region18: #{_mlp_forward.1} parent=1 // pred_check
      _
    $region19: #{_mlp_forward.1} parent=1 // pred_check_branch
      %38 = sbr.rel (0) target = $region21
    $region20: #{_mlp_forward.1} parent=1 // pred_region
      %39 = dma.done [#allocation5], 1536
    $region21: #{_mlp_forward.1} parent=1 // pred_fallthru
      _
    %v40 = vld [vmem:[#allocation2] sm:$0x3]
    %v41 = vld [vmem:[#allocation4] sm:$0xff]
    %v42 = vld [vmem:[%s2] sm:$0x1]
    %v44 = vlaneseq
    %v45 = vshrl.u32 %v44, 7
    %v46 = vsub.s32 0, %v45
    %v47 = vrot.slane %v42, %v46
    %vm49 = vcmask 64512
    %v51 = vsel %vm49, %v40, 0
    %53 = vmatprep.subr.mxu0 0.0
    %54 = vmatpush1.msra.mxu0 0.0
    %55 = vmatprep.subr.mxu0 0.0
    %56 = vmatpush1.msra.mxu0 0.0
    %57 = vmatprep.subr.mxu0 0.0
    %58 = vmatpush1.msra.mxu0 0.0
    %59 = vmatprep.subr.mxu0 0.0
    %60 = vmatpush1.msra.mxu0 0.0
    %61 = vmatprep.subr.mxu0 0.0
    %62 = vmatpush1.msra.mxu0 0.0
    %63 = vmatprep.subr.mxu0 0.0
    %64 = vmatpush1.msra.mxu0 0.0
    %65 = vmatprep.subr.mxu0 0.0
    %66 = vmatpush1.msra.mxu0 0.0
    %67 = vmatprep.subr.mxu0 0.0
    %68 = vmatpush1.msra.mxu0 0.0
    %69 = vmatprep.subr.mxu0 0.0
    %70 = vmatpush1.msra.mxu0 0.0
    %71 = vmatprep.subr.mxu0 0.0
    %72 = vmatpush1.msra.mxu0 0.0
    %73 = vmatprep.subr.mxu0 0.0
    %74 = vmatpush1.msra.mxu0 0.0
    %75 = vmatprep.subr.mxu0 0.0
    %76 = vmatpush1.msra.mxu0 0.0
    %77 = vmatprep.subr.mxu0 0.0
    %78 = vmatpush1.msra.mxu0 0.0
    %79 = vmatprep.subr.mxu0 0.0
    %80 = vmatpush1.msra.mxu0 0.0
    %81 = vmatprep.subr.mxu0 0.0
    %82 = vmatpush1.msra.mxu0 0.0
    %83 = vmatprep.subr.mxu0 0.0
    %84 = vmatpush1.msra.mxu0 %v41
    %85 = vmatprep.subr.mxu0 0.0
    %86 = vmatpush2.msra.mxu0 0.0
    %87 = vmatprep.subr.mxu0 0.0
    %88 = vmatpush2.msra.mxu0 0.0
    %89 = vmatprep.subr.mxu0 0.0
    %90 = vmatpush2.msra.mxu0 0.0
    %91 = vmatprep.subr.mxu0 0.0
    %92 = vmatpush2.msra.mxu0 0.0
    %93 = vmatprep.subr.mxu0 0.0
    %94 = vmatpush2.msra.mxu0 0.0
    %95 = vmatprep.subr.mxu0 0.0
    %96 = vmatpush2.msra.mxu0 0.0
    %97 = vmatprep.subr.mxu0 0.0
    %98 = vmatpush2.msra.mxu0 0.0
    %99 = vmatprep.subr.mxu0 0.0
    %100 = vmatpush2.msra.mxu0 0.0
    %101 = vmatprep.subr.mxu0 0.0
    %102 = vmatpush2.msra.mxu0 0.0
    %103 = vmatprep.subr.mxu0 0.0
    %104 = vmatpush2.msra.mxu0 0.0
    %105 = vmatprep.subr.mxu0 0.0
    %106 = vmatpush2.msra.mxu0 0.0
    %107 = vmatprep.subr.mxu0 0.0
    %108 = vmatpush2.msra.mxu0 0.0
    %109 = vmatprep.subr.mxu0 0.0
    %110 = vmatpush2.msra.mxu0 0.0
    %111 = vmatprep.subr.mxu0 0.0
    %112 = vmatpush2.msra.mxu0 0.0
    %113 = vmatprep.subr.mxu0 0.0
    %114 = vmatpush2.msra.mxu0 0.0
    %115 = vmatprep.subr.mxu0 0.0
    %116 = vmatpush2.msra.mxu0 0.0
    %117 = vmatprep.mubr.f32.mxu0 0.0
    %118 = vmatmul.mubr.f32.gmra.mxu0 %v51
    %v119 = vpop.f32.mrf.mxu0
    %v120 = vadd.f32 %v47, %v119
    %v121 = vpop.f32.mrf.mxu0
    %122 = vdwg.mxu0
    %v123 = vmax.f32 %v120, 0.0
    %s124 = scalar_lea.vmem [#allocation4], 32
    %v125 = vld [vmem:[%s124] sm:$0xff]
    %v126 = vld [vmem:[%s124 + $0x8] sm:$0xff]
    %v127 = vld [vmem:[%s124 + $0x10] sm:$0xff]
    %v128 = vld [vmem:[%s124 + $0x18] sm:$0xff]
    %s129 = scalar_lea.vmem %s2, 1
    %v130 = vld [vmem:[%s129] sm:$0x1]
    %v132 = vlaneseq
    %v133 = vshrl.u32 %v132, 7
    %v134 = vsub.s32 0, %v133
    %v135 = vrot.slane %v130, %v134
    %vm137 = vcmask 261120
    %v139 = vsel %vm137, %v123, 0
    %141 = vmatprep.subr.mxu0 0.0
    %142 = vmatpush1.msra.mxu0 0.0
    %143 = vmatprep.subr.mxu0 0.0
    %144 = vmatpush1.msra.mxu0 0.0
    %145 = vmatprep.subr.mxu0 0.0
    %146 = vmatpush1.msra.mxu0 0.0
    %147 = vmatprep.subr.mxu0 0.0
    %148 = vmatpush1.msra.mxu0 0.0
    %149 = vmatprep.subr.mxu0 0.0
    %150 = vmatpush1.msra.mxu0 0.0
    %151 = vmatprep.subr.mxu0 0.0
    %152 = vmatpush1.msra.mxu0 0.0
    %153 = vmatprep.subr.mxu0 0.0
    %154 = vmatpush1.msra.mxu0 0.0
    %155 = vmatprep.subr.mxu0 0.0
    %156 = vmatpush1.msra.mxu0 0.0
    %157 = vmatprep.subr.mxu0 0.0
    %158 = vmatpush1.msra.mxu0 0.0
    %159 = vmatprep.subr.mxu0 0.0
    %160 = vmatpush1.msra.mxu0 0.0
    %161 = vmatprep.subr.mxu0 0.0
    %162 = vmatpush1.msra.mxu0 0.0
    %163 = vmatprep.subr.mxu0 0.0
    %164 = vmatpush1.msra.mxu0 0.0
    %165 = vmatprep.subr.mxu0 0.0
    %166 = vmatpush1.msra.mxu0 %v128
    %167 = vmatprep.subr.mxu0 0.0
    %168 = vmatpush1.msra.mxu0 %v127
    %169 = vmatprep.subr.mxu0 0.0
    %170 = vmatpush1.msra.mxu0 %v126
    %171 = vmatprep.subr.mxu0 0.0
    %172 = vmatpush1.msra.mxu0 %v125
    %173 = vmatprep.subr.mxu0 0.0
    %174 = vmatpush2.msra.mxu0 0.0
    %175 = vmatprep.subr.mxu0 0.0
    %176 = vmatpush2.msra.mxu0 0.0
    %177 = vmatprep.subr.mxu0 0.0
    %178 = vmatpush2.msra.mxu0 0.0
    %179 = vmatprep.subr.mxu0 0.0
    %180 = vmatpush2.msra.mxu0 0.0
    %181 = vmatprep.subr.mxu0 0.0
    %182 = vmatpush2.msra.mxu0 0.0
    %183 = vmatprep.subr.mxu0 0.0
    %184 = vmatpush2.msra.mxu0 0.0
    %185 = vmatprep.subr.mxu0 0.0
    %186 = vmatpush2.msra.mxu0 0.0
    %187 = vmatprep.subr.mxu0 0.0
    %188 = vmatpush2.msra.mxu0 0.0
    %189 = vmatprep.subr.mxu0 0.0
    %190 = vmatpush2.msra.mxu0 0.0
    %191 = vmatprep.subr.mxu0 0.0
    %192 = vmatpush2.msra.mxu0 0.0
    %193 = vmatprep.subr.mxu0 0.0
    %194 = vmatpush2.msra.mxu0 0.0
    %195 = vmatprep.subr.mxu0 0.0
    %196 = vmatpush2.msra.mxu0 0.0
    %197 = vmatprep.subr.mxu0 0.0
    %198 = vmatpush2.msra.mxu0 0.0
    %199 = vmatprep.subr.mxu0 0.0
    %200 = vmatpush2.msra.mxu0 0.0
    %201 = vmatprep.subr.mxu0 0.0
    %202 = vmatpush2.msra.mxu0 0.0
    %203 = vmatprep.subr.mxu0 0.0
    %204 = vmatpush2.msra.mxu0 0.0
    %205 = vmatprep.mubr.f32.mxu0 0.0
    %206 = vmatmul.mubr.f32.gmra.mxu0 %v139
    %v207 = vpop.f32.mrf.mxu0
    %v208 = vadd.f32 %v135, %v207
    %v209 = vpop.f32.mrf.mxu0
    %210 = vdwg.mxu0
    %v211 = vmax.f32 %v208, 0.0
    %s212 = scalar_lea.vmem [#allocation4], 64
    %v213 = vld [vmem:[%s212] sm:$0xff]
    %v214 = vld [vmem:[%s212 + $0x8] sm:$0xff]
    %v215 = vld [vmem:[%s212 + $0x10] sm:$0xff]
    %v216 = vld [vmem:[%s212 + $0x18] sm:$0xff]
    %s217 = scalar_lea.vmem %s2, 2
    %v218 = vld [vmem:[%s217] sm:$0x1]
    %v220 = vlaneseq
    %v221 = vshrl.u32 %v220, 7
    %v222 = vsub.s32 0, %v221
    %v223 = vrot.slane %v218, %v222
    %v226 = vsel %vm137, %v211, 0
    %228 = vmatprep.subr.mxu0 0.0
    %229 = vmatpush1.msra.mxu0 0.0
    %230 = vmatprep.subr.mxu0 0.0
    %231 = vmatpush1.msra.mxu0 0.0
    %232 = vmatprep.subr.mxu0 0.0
    %233 = vmatpush1.msra.mxu0 0.0
    %234 = vmatprep.subr.mxu0 0.0
    %235 = vmatpush1.msra.mxu0 0.0
    %236 = vmatprep.subr.mxu0 0.0
    %237 = vmatpush1.msra.mxu0 0.0
    %238 = vmatprep.subr.mxu0 0.0
    %239 = vmatpush1.msra.mxu0 0.0
    %240 = vmatprep.subr.mxu0 0.0
    %241 = vmatpush1.msra.mxu0 0.0
    %242 = vmatprep.subr.mxu0 0.0
    %243 = vmatpush1.msra.mxu0 0.0
    %244 = vmatprep.subr.mxu0 0.0
    %245 = vmatpush1.msra.mxu0 0.0
    %246 = vmatprep.subr.mxu0 0.0
    %247 = vmatpush1.msra.mxu0 0.0
    %248 = vmatprep.subr.mxu0 0.0
    %249 = vmatpush1.msra.mxu0 0.0
    %250 = vmatprep.subr.mxu0 0.0
    %251 = vmatpush1.msra.mxu0 0.0
    %252 = vmatprep.subr.mxu0 0.0
    %253 = vmatpush1.msra.mxu0 %v216
    %254 = vmatprep.subr.mxu0 0.0
    %255 = vmatpush1.msra.mxu0 %v215
    %256 = vmatprep.subr.mxu0 0.0
    %257 = vmatpush1.msra.mxu0 %v214
    %258 = vmatprep.subr.mxu0 0.0
    %259 = vmatpush1.msra.mxu0 %v213
    %260 = vmatprep.subr.mxu0 0.0
    %261 = vmatpush2.msra.mxu0 0.0
    %262 = vmatprep.subr.mxu0 0.0
    %263 = vmatpush2.msra.mxu0 0.0
    %264 = vmatprep.subr.mxu0 0.0
    %265 = vmatpush2.msra.mxu0 0.0
    %266 = vmatprep.subr.mxu0 0.0
    %267 = vmatpush2.msra.mxu0 0.0
    %268 = vmatprep.subr.mxu0 0.0
    %269 = vmatpush2.msra.mxu0 0.0
    %270 = vmatprep.subr.mxu0 0.0
    %271 = vmatpush2.msra.mxu0 0.0
    %272 = vmatprep.subr.mxu0 0.0
    %273 = vmatpush2.msra.mxu0 0.0
    %274 = vmatprep.subr.mxu0 0.0
    %275 = vmatpush2.msra.mxu0 0.0
    %276 = vmatprep.subr.mxu0 0.0
    %277 = vmatpush2.msra.mxu0 0.0
    %278 = vmatprep.subr.mxu0 0.0
    %279 = vmatpush2.msra.mxu0 0.0
    %280 = vmatprep.subr.mxu0 0.0
    %281 = vmatpush2.msra.mxu0 0.0
    %282 = vmatprep.subr.mxu0 0.0
    %283 = vmatpush2.msra.mxu0 0.0
    %284 = vmatprep.subr.mxu0 0.0
    %285 = vmatpush2.msra.mxu0 0.0
    %286 = vmatprep.subr.mxu0 0.0
    %287 = vmatpush2.msra.mxu0 0.0
    %288 = vmatprep.subr.mxu0 0.0
    %289 = vmatpush2.msra.mxu0 0.0
    %290 = vmatprep.subr.mxu0 0.0
    %291 = vmatpush2.msra.mxu0 0.0
    %292 = vmatprep.mubr.f32.mxu0 0.0
    %293 = vmatmul.mubr.f32.gmra.mxu0 %v226
    %v294 = vpop.f32.mrf.mxu0
    %v295 = vadd.f32 %v223, %v294
    %v296 = vpop.f32.mrf.mxu0
    %297 = vdwg.mxu0
    %vm298 = vcmask 1024
    %299 = vst.msk [vmem:[%s3] sm:$0x3] %vm298, %v295
    // Predicated region
    $region22: #{_mlp_forward.1} parent=1 // pred_check
      _
    $region23: #{_mlp_forward.1} parent=1 // pred_check_branch
      %301 = sbr.rel (0) target = $region25
    $region24: #{_mlp_forward.1} parent=1 // pred_region
      _
    $region25: #{_mlp_forward.1} parent=1 // pred_fallthru
      _
    // Predicated region
    $region26: #{_mlp_forward.1} parent=1 // pred_check
      _
    $region27: #{_mlp_forward.1} parent=1 // pred_check_branch
      %303 = sbr.rel (0) target = $region29
    $region28: #{_mlp_forward.1} parent=1 // pred_region
      _
    $region29: #{_mlp_forward.1} parent=1 // pred_fallthru
      _
    %304 = vsyncpa [#allocation3], 1
    %305 = vsyncpa [#allocation5], 1

</llo_original>
